<compile_context>
chip_gen: v7x
topology: tpu7x:2x2x1
jax: 0.10.0
libtpu: 0.0.40
codegen_flags: <defaults>
</compile_context>

<pallas_src>
import functools

import jax
import jax.numpy as jnp
from jax import lax
from jax.experimental import pallas as pl
from jax.experimental.pallas import tpu as pltpu


def _write_partial(out_ref, total):
    """Write scalar `total` into lane [0,0] of the (1, 8, 128) output block."""
    r = lax.broadcasted_iota(jnp.int32, (8, 128), 0)
    c = lax.broadcasted_iota(jnp.int32, (8, 128), 1)
    out_ref[0] = jnp.where((r == 0) & (c == 0), total, jnp.float32(0.0))


def _bce_from_label_kernel(logit_ref, label_ref, out_ref, acc_ref, *,
                           hw, tile_hw, ignore_index, ignore_bg, need_mask):
    """Grid = (N, num_hw_tiles).  Blocks: logit (1, C, tile), label (1, 1, tile)."""
    s = pl.program_id(1)

    @pl.when(s == 0)
    def _():
        acc_ref[...] = jnp.zeros_like(acc_ref)

    x = logit_ref[0].astype(jnp.float32)              # (C, tile), lane-dense
    lbl = label_ref[0]                                # (1, tile) int32
    C, T = x.shape

    # One-hot target built against the channel index on the sublane axis.
    cls = lax.broadcasted_iota(jnp.int32, (C, T), 0)
    match = (cls == lbl) & (lbl != ignore_index)
    if ignore_bg:
        match = match & (cls != 0)
    t = match.astype(jnp.float32)

    # Numerically-stable BCE-with-logits (same as torch):
    #   max(x, 0) - x*t + log(1 + exp(-|x|))
    loss = jnp.maximum(x, 0.0) - x * t + jnp.log1p(jnp.exp(-jnp.abs(x)))

    if need_mask:  # static: only emitted when H*W % tile != 0
        col = lax.broadcasted_iota(jnp.int32, (C, T), 1) + s * tile_hw
        loss = jnp.where(col < hw, loss, 0.0)

    acc_ref[...] += loss                              # pure VPU add, no XLU

    @pl.when(s == pl.num_programs(1) - 1)
    def _():
        _write_partial(out_ref, jnp.sum(acc_ref[...]))


def _bce_from_target_kernel(logit_ref, target_ref, out_ref, acc_ref, *,
                            hw, tile_hw, need_mask):
    """4-D label case (explicit target).  Blocks: (1, C, tile) for both inputs."""
    s = pl.program_id(1)

    @pl.when(s == 0)
    def _():
        acc_ref[...] = jnp.zeros_like(acc_ref)

    x = logit_ref[0].astype(jnp.float32)              # (C, tile)
    t = target_ref[0].astype(jnp.float32)             # (C, tile)
    C, T = x.shape

    loss = jnp.maximum(x, 0.0) - x * t + jnp.log1p(jnp.exp(-jnp.abs(x)))

    if need_mask:
        col = lax.broadcasted_iota(jnp.int32, (C, T), 1) + s * tile_hw
        loss = jnp.where(col < hw, loss, 0.0)

    acc_ref[...] += loss

    @pl.when(s == pl.num_programs(1) - 1)
    def _():
        _write_partial(out_ref, jnp.sum(acc_ref[...]))


def bce_loss(logit, label, *, ignore_index=255, ignore_bg=True, tile_hw=8192):
    """Pallas implementation of BCELoss.forward(logit, label) (logit_old=None).

    logit: (N, C, H, W) float (f32 or bf16)
    label: (N, H, W) int  -> one-hot target built in-kernel
           or (N, C, H, W) float -> used directly as target
    returns: scalar float32 loss (reduction='mean', pos_weight=None)
    """
    N, C, H, W = logit.shape
    HW = H * W

    # Free reshapes only (NCHW stays contiguous): no transpose, no padding.
    x3 = logit.reshape(N, C, HW)

    tile = HW if HW <= tile_hw else tile_hw
    if tile != HW:
        assert tile % 128 == 0, "tile_hw must be a multiple of 128"
    num_s = pl.cdiv(HW, tile)
    need_mask = (HW % tile) != 0
    inv_count = 1.0 / float(N * C * H * W)

    if label.ndim == 3:
        lbl3 = label.reshape(N, 1, HW).astype(jnp.int32)   # lane-dense labels
        kernel = functools.partial(
            _bce_from_label_kernel, hw=HW, tile_hw=tile,
            ignore_index=ignore_index, ignore_bg=ignore_bg, need_mask=need_mask)
        in_specs = [pl.BlockSpec((1, C, tile), lambda n, s: (n, 0, s)),
                    pl.BlockSpec((1, 1, tile), lambda n, s: (n, 0, s))]
        args = (x3, lbl3)
    elif label.ndim == 4:
        t3 = label.reshape(N, C, HW)
        kernel = functools.partial(
            _bce_from_target_kernel, hw=HW, tile_hw=tile, need_mask=need_mask)
        in_specs = [pl.BlockSpec((1, C, tile), lambda n, s: (n, 0, s)),
                    pl.BlockSpec((1, C, tile), lambda n, s: (n, 0, s))]
        args = (x3, t3)
    else:
        raise NotImplementedError

    # One (8,128) partial-sum slab per batch element; the leading grid axis is
    # "parallel" so v7x megacore splits batches across its two TensorCores.
    partials = pl.pallas_call(
        kernel,
        out_shape=jax.ShapeDtypeStruct((N, 8, 128), jnp.float32),
        grid_spec=pltpu.PrefetchScalarGridSpec(
            num_scalar_prefetch=0,
            grid=(N, num_s),
            in_specs=in_specs,
            out_specs=pl.BlockSpec((1, 8, 128), lambda n, s: (n, 0, 0)),
            scratch_shapes=[pltpu.VMEM((C, tile), jnp.float32)]),
        compiler_params=pltpu.CompilerParams(
            dimension_semantics=("parallel", "arbitrary")),
    )(*args)

    return jnp.sum(partials) * jnp.float32(inv_count)


def _reference_bce_loss(logit, label, *, ignore_index=255, ignore_bg=True):
    """Plain-JAX reference mirroring the PyTorch module (logit_old=None path)."""
    N, C, H, W = logit.shape
    if label.ndim == 3:
        cls = jnp.arange(C, dtype=jnp.int32)[None, :, None, None]
        lbl = label[:, None, :, :].astype(jnp.int32)
        match = (cls == lbl) & (lbl != ignore_index)
        if ignore_bg:
            match = match & (cls != 0)
        target = match.astype(jnp.float32)
    else:
        target = label.astype(jnp.float32)
    x = logit.astype(jnp.float32)
    loss = jnp.maximum(x, 0.0) - x * target + jnp.log1p(jnp.exp(-jnp.abs(x)))
    return jnp.mean(loss)


if __name__ == "__main__":
    key = jax.random.PRNGKey(0)
    k1, k2, k3, k4 = jax.random.split(key, 4)

    N, C, H, W = 2, 4, 16, 16
    logit = jax.random.normal(k1, (N, C, H, W), dtype=jnp.float32)
    label = jax.random.randint(k2, (N, H, W), 0, C).astype(jnp.int32)
    # Sprinkle some ignore_index (255) pixels, as in real segmentation labels.
    ignore_mask = jax.random.uniform(k3, (N, H, W)) < 0.1
    label = jnp.where(ignore_mask, 255, label)

    # 3-D label path.
    loss = jax.block_until_ready(bce_loss(logit, label))
    ref = _reference_bce_loss(logit, label)
    assert jnp.allclose(loss, ref, rtol=1e-5, atol=1e-6), (loss, ref)

    # 4-D explicit-target path.
    target4d = (jax.random.uniform(k4, (N, C, H, W)) > 0.5).astype(jnp.float32)
    loss4d = jax.block_until_ready(bce_loss(logit, target4d))
    ref4d = _reference_bce_loss(logit, target4d)
    assert jnp.allclose(loss4d, ref4d, rtol=1e-5, atol=1e-6), (loss4d, ref4d)

    # Non-divisible spatial extent: exercises the in-kernel overhang mask
    # (no host-side padding anywhere).
    H2, W2 = 16, 18
    logit2 = jax.random.normal(k1, (N, C, H2, W2), dtype=jnp.float32)
    label2 = jax.random.randint(k2, (N, H2, W2), 0, C).astype(jnp.int32)
    loss2 = jax.block_until_ready(bce_loss(logit2, label2, tile_hw=128))
    ref2 = _reference_bce_loss(logit2, label2)
    assert jnp.allclose(loss2, ref2, rtol=1e-5, atol=1e-6), (loss2, ref2)

    # bf16 logits (halves HBM traffic on mem-bound v5e/v6e); math stays f32,
    # so it matches a reference computed from the same bf16 inputs exactly.
    logit_bf16 = logit.astype(jnp.bfloat16)
    loss_bf = jax.block_until_ready(bce_loss(logit_bf16, label))
    ref_bf = _reference_bce_loss(logit_bf16, label)
    assert jnp.allclose(loss_bf, ref_bf, rtol=1e-5, atol=1e-6), (loss_bf, ref_bf)

    print("KERNEL_OK")
</pallas_src>

<mosaic_0001>
module attributes {stable_mosaic.version = 11 : i64} {
  func.func @_bce_from_label_kernel(%arg0: i32, %arg1: i32, %arg2: memref<1x4x256xf32, #tpu.memory_space<vmem>>, %arg3: memref<1x1x256xi32, #tpu.memory_space<vmem>>, %arg4: memref<1x8x128xf32, #tpu.memory_space<vmem>>, %arg5: memref<4x256xf32, #tpu.memory_space<vmem>>) attributes {dimension_semantics = [#tpu.dimension_semantics<parallel>, #tpu.dimension_semantics<arbitrary>], iteration_bounds = array<i64: 2, 1>, scalar_prefetch = 0 : i64, scratch_operands = 1 : i64, tpu.core_type = #tpu.core_type<tc>, window_params = [{transform_indices = @transform_0, window_bounds = array<i64: 1, 4, 256>}, {transform_indices = @transform_1, window_bounds = array<i64: 1, 1, 256>}, {transform_indices = @transform_2, window_bounds = array<i64: 1, 8, 128>}]} {
    %c0_i32 = arith.constant 0 : i32
    %0 = arith.cmpi eq, %arg1, %c0_i32 : i32
    %1 = arith.extui %0 : i1 to i32
    %c0_i32_0 = arith.constant 0 : i32
    %2 = arith.cmpi ne, %1, %c0_i32_0 : i32
    scf.if %2 {
      %cst_14 = arith.constant 0.000000e+00 : f32
      %35 = vector.broadcast %cst_14 : f32 to vector<4x256xf32>
      %c0_15 = arith.constant 0 : index
      %c0_16 = arith.constant 0 : index
      %36 = vector.load %arg5[%c0_15, %c0_16] : memref<4x256xf32, #tpu.memory_space<vmem>>, vector<4x256xf32>
      tpu.vector_store %arg5[%c0_15, %c0_16], %35 {strides = array<i32>} : memref<4x256xf32, #tpu.memory_space<vmem>>, vector<4x256xf32>,
    } else {
    }
    %c0 = arith.constant 0 : index
    %c0_1 = arith.constant 0 : index
    %c0_2 = arith.constant 0 : index
    %3 = vector.load %arg2[%c0, %c0_1, %c0_2] : memref<1x4x256xf32, #tpu.memory_space<vmem>>, vector<1x4x256xf32>
    %4 = vector.shape_cast %3 : vector<1x4x256xf32> to vector<4x256xf32>
    %c0_3 = arith.constant 0 : index
    %c0_4 = arith.constant 0 : index
    %c0_5 = arith.constant 0 : index
    %5 = vector.load %arg3[%c0_3, %c0_4, %c0_5] : memref<1x1x256xi32, #tpu.memory_space<vmem>>, vector<1x1x256xi32>
    %6 = vector.shape_cast %5 : vector<1x1x256xi32> to vector<1x256xi32>
    %7 = tpu.iota {dimensions = array<i32: 0>} : vector<4x256xi32>
    %8 = vector.broadcast %6 : vector<1x256xi32> to vector<4x256xi32>
    %9 = arith.cmpi eq, %7, %8 : vector<4x256xi32>
    %c255_i32 = arith.constant 255 : i32
    %10 = vector.broadcast %c255_i32 : i32 to vector<1x256xi32>
    %11 = arith.cmpi ne, %6, %10 : vector<1x256xi32>
    %12 = vector.broadcast %11 : vector<1x256xi1> to vector<4x256xi1>
    %13 = arith.andi %9, %12 : vector<4x256xi1>
    %c0_i32_6 = arith.constant 0 : i32
    %14 = vector.broadcast %c0_i32_6 : i32 to vector<4x256xi32>
    %15 = arith.cmpi ne, %7, %14 : vector<4x256xi32>
    %16 = arith.andi %13, %15 : vector<4x256xi1>
    %17 = arith.extui %16 : vector<4x256xi1> to vector<4x256xi32>
    %18 = arith.sitofp %17 : vector<4x256xi32> to vector<4x256xf32>
    %cst = arith.constant 0.000000e+00 : f32
    %19 = vector.broadcast %cst : f32 to vector<4x256xf32>
    %20 = arith.maximumf %4, %19 : vector<4x256xf32>
    %21 = arith.mulf %4, %18 : vector<4x256xf32>
    %22 = arith.subf %20, %21 : vector<4x256xf32>
    %23 = math.absf %4 : vector<4x256xf32>
    %cst_7 = arith.constant 0.000000e+00 : f32
    %24 = vector.broadcast %cst_7 : f32 to vector<4x256xf32>
    %25 = arith.subf %24, %23 : vector<4x256xf32>
    %26 = math.exp %25 : vector<4x256xf32>
    %27 = math.log1p %26 : vector<4x256xf32>
    %28 = arith.addf %22, %27 : vector<4x256xf32>
    %c0_8 = arith.constant 0 : index
    %c0_9 = arith.constant 0 : index
    %29 = vector.load %arg5[%c0_8, %c0_9] : memref<4x256xf32, #tpu.memory_space<vmem>>, vector<4x256xf32>
    %30 = arith.addf %29, %28 : vector<4x256xf32>
    %c0_10 = arith.constant 0 : index
    %c0_11 = arith.constant 0 : index
    %31 = vector.load %arg5[%c0_10, %c0_11] : memref<4x256xf32, #tpu.memory_space<vmem>>, vector<4x256xf32>
    tpu.vector_store %arg5[%c0_10, %c0_11], %30 {strides = array<i32>} : memref<4x256xf32, #tpu.memory_space<vmem>>, vector<4x256xf32>,
    %c0_i32_12 = arith.constant 0 : i32
    %32 = arith.cmpi eq, %arg1, %c0_i32_12 : i32
    %33 = arith.extui %32 : i1 to i32
    %c0_i32_13 = arith.constant 0 : i32
    %34 = arith.cmpi ne, %33, %c0_i32_13 : i32
    scf.if %34 {
      %c0_14 = arith.constant 0 : index
      %c0_15 = arith.constant 0 : index
      %35 = vector.load %arg5[%c0_14, %c0_15] : memref<4x256xf32, #tpu.memory_space<vmem>>, vector<4x256xf32>
      %36 = vector.shape_cast %35 : vector<4x256xf32> to vector<1x4x256xf32>
      %cst_16 = arith.constant dense<0.000000e+00> : vector<1xf32>
      %37 = vector.multi_reduction <add>, %36, %cst_16 [1, 2] : vector<1x4x256xf32> to vector<1xf32>
      %38 = vector.shape_cast %37 : vector<1xf32> to vector<1x1x1xf32>
      %39 = vector.extract %38[0, 0, 0] : f32 from vector<1x1x1xf32>
      %40 = tpu.iota {dimensions = array<i32: 0>} : vector<8x128xi32>
      %41 = tpu.iota {dimensions = array<i32: 1>} : vector<8x128xi32>
      %c0_i32_17 = arith.constant 0 : i32
      %42 = vector.broadcast %c0_i32_17 : i32 to vector<8x128xi32>
      %43 = arith.cmpi eq, %40, %42 : vector<8x128xi32>
      %c0_i32_18 = arith.constant 0 : i32
      %44 = vector.broadcast %c0_i32_18 : i32 to vector<8x128xi32>
      %45 = arith.cmpi eq, %41, %44 : vector<8x128xi32>
      %46 = arith.andi %43, %45 : vector<8x128xi1>
      %cst_19 = arith.constant 0.000000e+00 : f32
      %47 = vector.broadcast %39 : f32 to vector<8x128xf32>
      %48 = vector.broadcast %cst_19 : f32 to vector<8x128xf32>
      %49 = arith.select %46, %47, %48 : vector<8x128xi1>, vector<8x128xf32>
      %c0_20 = arith.constant 0 : index
      %c0_21 = arith.constant 0 : index
      %c0_22 = arith.constant 0 : index
      %50 = vector.load %arg4[%c0_20, %c0_21, %c0_22] : memref<1x8x128xf32, #tpu.memory_space<vmem>>, vector<1x8x128xf32>
      %51 = vector.shape_cast %50 : vector<1x8x128xf32> to vector<8x128xf32>
      %52 = vector.shape_cast %49 : vector<8x128xf32> to vector<1x8x128xf32>
      tpu.vector_store %arg4[%c0_20, %c0_21, %c0_22], %52 {strides = array<i32>} : memref<1x8x128xf32, #tpu.memory_space<vmem>>, vector<1x8x128xf32>,
    } else {
    }
    return
  }
  func.func @transform_0(%arg0: i32, %arg1: i32) -> (i32, i32, i32) {
    %c0_i32 = arith.constant 0 : i32
    %c0_i32_0 = arith.constant 0 : i32
    return %arg0, %c0_i32, %arg1 : i32, i32, i32
  }
  func.func @transform_1(%arg0: i32, %arg1: i32) -> (i32, i32, i32) {
    %c0_i32 = arith.constant 0 : i32
    %c0_i32_0 = arith.constant 0 : i32
    return %arg0, %c0_i32, %arg1 : i32, i32, i32
  }
  func.func @transform_2(%arg0: i32, %arg1: i32) -> (i32, i32, i32) {
    %c0_i32 = arith.constant 0 : i32
    %c0_i32_0 = arith.constant 0 : i32
    %c0_i32_1 = arith.constant 0 : i32
    return %arg0, %c0_i32, %c0_i32_0 : i32, i32, i32
  }
}

</mosaic_0001>

<llo_original>
// kernel: tpu_custom_call.1
$region0: #{tpu_custom_call.1}
  #allocation0 [shape = 'u32[]', space=smem, size = 0x4, offset = 0x4, fixed_abs, tag = 'smem constant byte address 0x4 - core index']
  #allocation1 [shape = 'u32[144,128]{1,0:T(1,128)}', space=vmem, size = 0x12000, scoped, tag = 'internal scratch']
  #allocation2 [shape = 'f32[4,256]{1,0:T(4,128)}', space=vmem, size = 0x1000, scoped, tag = 'scratch operand']
  %s0 = inlined_call_operand.hbm [shape: f32[2,4,256], index: 0, kind: input, shape index: {}]
  %s1 = inlined_call_operand.hbm [shape: s32[2,1,256], index: 1, kind: input, shape index: {}]
  %s2 = inlined_call_operand.hbm [shape: f32[2,8,128], index: 2, kind: output, shape index: {}]
  %s3 = sld [smem:[#allocation0]]
  $region57: #{tpu_custom_call.1} parent=0
    _
  %s5 = ssub.s32 1, %s3
  %s6 = scalar_select 0, %s5, %s3
  $region1: #{tpu_custom_call.1} parent=0
    #allocation3 [shape = 'u8[8192]{0}', space=vmem, size = 0x2000, scoped, tag = 'input window, operand 0']
    #allocation4 [shape = 's32[2]{0}', space=sflag, size = 0x8, scoped, tag = 'scoped memory for tpu_custom_call.1']
    #allocation5 [shape = 's32[2]{0}', space=sflag, size = 0x8, scoped, tag = 'scoped memory for tpu_custom_call.1']
    #allocation6 [shape = 'u8[2048]{0}', space=vmem, size = 0x800, scoped, tag = 'input window, operand 1']
    #allocation7 [shape = 's32[2]{0}', space=sflag, size = 0x8, scoped, tag = 'scoped memory for tpu_custom_call.1']
    #allocation8 [shape = 'u8[8192]{0}', space=vmem, size = 0x2000, scoped, tag = 'output window, operand 0']
    %7 = vsyncpa [#allocation4], 0
    %s8 = scalar_lea.sflag [#allocation4], 1
    %9 = vsyncpa %s8, 0
    %10 = vsyncpa [#allocation7], 0
    %s11 = scalar_lea.sflag [#allocation7], 1
    %12 = vsyncpa %s11, 0
    %13 = vsyncpa [#allocation5], 0
    %s14 = scalar_lea.sflag [#allocation5], 1
    %15 = vsyncpa %s14, 0
    loop: start=0, step=1, limit=4
    $region2: #{tpu_custom_call.1} parent=1 // loop_pre_header
      _
    $region3: #{tpu_custom_call.1} parent=1 // loop_header
      %s17 = sphi 0, %s21
      %p18 = scmp.ge.s32.totalorder %s17, 4
      %s24 = sphi 0, %s36
      %s25 = sphi 0, %s32
      %s26 = sphi 0, %s24
      %s27 = sphi 0, %s25
      %s28 = sphi 0, %s26
      %s29 = sphi 0, %s27
      %s41 = sphi 0, %s43
      %s44 = sphi 0, %s41
      %s45 = sphi 0, %s44
      %s61 = sphi 0, %s45
      %s69 = sphi 0, %s71
      %s72 = sphi 0, %s69
      %s73 = sphi 0, %s72
      %s89 = sphi 0, %s73
      %s95 = sphi 0, %s97
      %s98 = sphi 0, %s95
      %s99 = sphi 0, %s98
      %s115 = sphi 0, %s99
    $region4: #{tpu_custom_call.1} parent=1 // loop_header_branch
      %20 = sbr.rel (%p18) target = $region8
    $region5: #{tpu_custom_call.1} parent=1 // loop_body
      %s22 = ssub.s32 %s17, 1
      %s23 = ssub.s32 %s17, 2
      %s30 = sadd.s32 1, %s25
      %p31 = scmp.ge.s32.totalorder %s30, 1
      %s32 = scalar_select %p31, 0, %s30
      %s33 = sadd.s32 1, %s24
      %s34 = scalar_select %p31, %s33, %s24
      %p35 = scmp.ge.s32.totalorder %s34, 2
      %s36 = scalar_select %p35, 0, %s34
      %s37 = ssub.s32 %s24, %s36
      %s38 = ssub.s32 %s25, %s32
      %s39 = sor.u32 %s37, %s38
      %p40 = scmp.eq.s32.totalorder %s39, 0
      %s42 = sadd.s32 %s41, 1
      %s43 = scalar_select %p40, %s41, %s42
      %p46 = pneg %p40
      %p47 = scmp.eq.s32.totalorder %s17, 1
      %p48 = por %p46, %p47
      %p49 = scmp.ne.s32.totalorder %s41, %s44
      %p50 = scmp.eq.s32.totalorder %s17, 0
      %p51 = por %p49, %p50
      %p52 = scmp.ne.s32.totalorder %s41, %s44
      %p53 = scmp.eq.s32.totalorder %s22, 1
      %p54 = por %p52, %p53
      %p55 = scmp.ne.s32.totalorder %s44, %s45
      %p56 = scmp.eq.s32.totalorder %s22, 0
      %p57 = por %p55, %p56
      %p58 = scmp.ne.s32.totalorder %s44, %s45
      %p59 = scmp.eq.s32.totalorder %s23, 1
      %p60 = por %p58, %p59
      %p62 = scmp.ne.s32.totalorder %s45, %s61
      %p63 = scmp.eq.s32.totalorder %s23, 0
      %p64 = por %p62, %p63
      %s65 = ssub.s32 %s24, %s36
      %s66 = ssub.s32 %s25, %s32
      %s67 = sor.u32 %s65, %s66
      %p68 = scmp.eq.s32.totalorder %s67, 0
      %s70 = sadd.s32 %s69, 1
      %s71 = scalar_select %p68, %s69, %s70
      %p74 = pneg %p68
      %p75 = scmp.eq.s32.totalorder %s17, 1
      %p76 = por %p74, %p75
      %p77 = scmp.ne.s32.totalorder %s69, %s72
      %p78 = scmp.eq.s32.totalorder %s17, 0
      %p79 = por %p77, %p78
      %p80 = scmp.ne.s32.totalorder %s69, %s72
      %p81 = scmp.eq.s32.totalorder %s22, 1
      %p82 = por %p80, %p81
      %p83 = scmp.ne.s32.totalorder %s72, %s73
      %p84 = scmp.eq.s32.totalorder %s22, 0
      %p85 = por %p83, %p84
      %p86 = scmp.ne.s32.totalorder %s72, %s73
      %p87 = scmp.eq.s32.totalorder %s23, 1
      %p88 = por %p86, %p87
      %p90 = scmp.ne.s32.totalorder %s73, %s89
      %p91 = scmp.eq.s32.totalorder %s23, 0
      %p92 = por %p90, %p91
      %s93 = ssub.s32 %s24, %s36
      %p94 = scmp.eq.s32.totalorder %s93, 0
      %s96 = sadd.s32 %s95, 1
      %s97 = scalar_select %p94, %s95, %s96
      %p100 = pneg %p94
      %p101 = scmp.eq.s32.totalorder %s17, 1
      %p102 = por %p100, %p101
      %p103 = scmp.ne.s32.totalorder %s95, %s98
      %p104 = scmp.eq.s32.totalorder %s17, 0
      %p105 = por %p103, %p104
      %p106 = scmp.ne.s32.totalorder %s95, %s98
      %p107 = scmp.eq.s32.totalorder %s22, 1
      %p108 = por %p106, %p107
      %p109 = scmp.ne.s32.totalorder %s98, %s99
      %p110 = scmp.eq.s32.totalorder %s22, 0
      %p111 = por %p109, %p110
      %p112 = scmp.ne.s32.totalorder %s98, %s99
      %p113 = scmp.eq.s32.totalorder %s23, 1
      %p114 = por %p112, %p113
      %p116 = scmp.ne.s32.totalorder %s99, %s115
      %p117 = scmp.eq.s32.totalorder %s23, 0
      %p118 = por %p116, %p117
      %p119 = scmp.le.s32.totalorder 1, %s17
      %p120 = scmp.lt.s32.totalorder %s17, 3
      %p121 = pnand %p119, %p120
      %p122 = pneg %p121
      // Predicated region
      $region9: #{tpu_custom_call.1} parent=5 // pred_check
        _
      $region10: #{tpu_custom_call.1} parent=5 // pred_check_branch
        %124 = sbr.rel (%p121) target = $region12
      $region11: #{tpu_custom_call.1} parent=5 // pred_region
        %s125 = ssub.s32 %s17, 1
      $region12: #{tpu_custom_call.1} parent=5 // pred_fallthru
        _
      %p126 = scmp.lt.s32.totalorder %s17, 2
      // Predicated region
      $region13: #{tpu_custom_call.1} parent=5 // pred_check
        %p127 = pneg %p126
      $region14: #{tpu_custom_call.1} parent=5 // pred_check_branch
        %129 = sbr.rel (%p127) target = $region16
      $region15: #{tpu_custom_call.1} parent=5 // pred_region
        // Predicated region
        $region17: #{tpu_custom_call.1} parent=15 // pred_check
          %p130 = pneg %p51
        $region18: #{tpu_custom_call.1} parent=15 // pred_check_branch
          %132 = sbr.rel (%p130) target = $region20
        $region19: #{tpu_custom_call.1} parent=15 // pred_region
          %s133 = sand.u32 %s41, 1
          %s134 = scalar_lea.sflag [#allocation4], %s133
          %s135 = sand.u32 %s41, 1
          %s136 = smul.addr %s135, 8
          %s137 = scalar_lea.vmem [#allocation3], %s136
          %s138 = smul.u32 2, %s25
          %s140 = ssub.s32 128, 128
          %141 = vsyncadd %s134, %s140
          %s142 = smul.addr %s24, 2
          %s143 = sadd.s32 %s138, %s142
          %s144 = smul.addr %s143, 64
          %s145 = scalar_lea.hbm %s0, %s144
          %s147 = sshll.u32 %s137, 4
          %s148 = int_to_ptr.vmem [resolvable:$true] %s147
          %150 = dma.hbm_to_vmem [thread:$0]  %s145, 128, %s148, %s134
        $region20: #{tpu_custom_call.1} parent=15 // pred_fallthru
          _
        // Predicated region
        $region21: #{tpu_custom_call.1} parent=15 // pred_check
          %p151 = pneg %p79
        $region22: #{tpu_custom_call.1} parent=15 // pred_check_branch
          %153 = sbr.rel (%p151) target = $region24
        $region23: #{tpu_custom_call.1} parent=15 // pred_region
          %s154 = sand.u32 %s69, 1
          %s155 = scalar_lea.sflag [#allocation7], %s154
          %s156 = sand.u32 %s69, 1
          %s157 = smul.addr %s156, 2
          %s158 = scalar_lea.vmem [#allocation6], %s157
          %s159 = smul.u32 2, %s25
          %s161 = ssub.s32 32, 32
          %162 = vsyncadd %s155, %s161
          %s163 = smul.addr %s24, 2
          %s164 = sadd.s32 %s159, %s163
          %s165 = smul.addr %s164, 16
          %s166 = scalar_lea.hbm %s1, %s165
          %s168 = sshll.u32 %s158, 4
          %s169 = int_to_ptr.vmem [resolvable:$true] %s168
          %171 = dma.hbm_to_vmem [thread:$0]  %s166, 32, %s169, %s155
        $region24: #{tpu_custom_call.1} parent=15 // pred_fallthru
          _
      $region16: #{tpu_custom_call.1} parent=5 // pred_fallthru
        _
      %p172 = scmp.le.s32.totalorder 1, %s17
      %p173 = scmp.lt.s32.totalorder %s17, 3
      %p174 = pnand %p172, %p173
      %p175 = pneg %p174
      // Predicated region
      $region25: #{tpu_custom_call.1} parent=5 // pred_check
        _
      $region26: #{tpu_custom_call.1} parent=5 // pred_check_branch
        %177 = sbr.rel (%p174) target = $region28
      $region27: #{tpu_custom_call.1} parent=5 // pred_region
        %s178 = ssub.s32 %s17, 1
        %s179 = sand.u32 %s44, 1
        %s180 = scalar_lea.sflag [#allocation4], %s179
        %s181 = sand.u32 %s44, 1
        %s182 = smul.addr %s181, 8
        %s183 = scalar_lea.vmem [#allocation3], %s182
        // Predicated region
        $region29: #{tpu_custom_call.1} parent=27 // pred_check
          %p184 = pneg %p57
        $region30: #{tpu_custom_call.1} parent=27 // pred_check_branch
          %186 = sbr.rel (%p184) target = $region32
        $region31: #{tpu_custom_call.1} parent=27 // pred_region
          %187 = dma.done %s180, 128
        $region32: #{tpu_custom_call.1} parent=27 // pred_fallthru
          _
        %s188 = sand.u32 %s72, 1
        %s189 = scalar_lea.sflag [#allocation7], %s188
        %s190 = sand.u32 %s72, 1
        %s191 = smul.addr %s190, 2
        %s192 = scalar_lea.vmem [#allocation6], %s191
        // Predicated region
        $region33: #{tpu_custom_call.1} parent=27 // pred_check
          %p193 = pneg %p85
        $region34: #{tpu_custom_call.1} parent=27 // pred_check_branch
          %195 = sbr.rel (%p193) target = $region36
        $region35: #{tpu_custom_call.1} parent=27 // pred_region
          %196 = dma.done %s189, 32
        $region36: #{tpu_custom_call.1} parent=27 // pred_fallthru
          _
        %s197 = sand.u32 %s44, 1
        %s198 = scalar_lea.sflag [#allocation4], %s197
        %s199 = sand.u32 %s44, 1
        %s200 = smul.addr %s199, 8
        %s201 = scalar_lea.vmem [#allocation3], %s200
        %p202 = pneg %p57
        %p203 = pneg %p54
        %s204 = sand.u32 %s72, 1
        %s205 = scalar_lea.sflag [#allocation7], %s204
        %s206 = sand.u32 %s72, 1
        %s207 = smul.addr %s206, 2
        %s208 = scalar_lea.vmem [#allocation6], %s207
        %p209 = pneg %p85
        %p210 = pneg %p82
        %p211 = pneg %p111
        %p212 = pneg %p108
        %s213 = sand.u32 %s98, 1
        %s214 = scalar_lea.sflag [#allocation5], %s213
        %s215 = sand.u32 %s98, 1
        %s216 = smul.addr %s215, 8
        %s217 = scalar_lea.vmem [#allocation8], %s216
        %s218 = smul.u32 2, %s27
        %s219 = smul.u32 2, %s27
        %p220 = scmp.eq.s32.totalorder %s27, 0
        // Predicated region
        $region37: #{tpu_custom_call.1} parent=27 // pred_check
          %p221 = pneg %p220
        $region38: #{tpu_custom_call.1} parent=27 // pred_check_branch
          %223 = sbr.rel (%p221) target = $region40
        $region39: #{tpu_custom_call.1} parent=27 // pred_region
          %224 = vst [vmem:[#allocation2] sm:$0xff] 0.0
        $region40: #{tpu_custom_call.1} parent=27 // pred_fallthru
          _
        %v225 = vld [vmem:[%s183] sm:$0xff]
        %v226 = vld [vmem:[%s192] sm:$0x3]
        %v227 = vlaneseq
        %v228 = vshrl.u32 %v227, 7
        %v229 = vlaneseq
        %v230 = vshrl.u32 %v229, 7
        %v231 = vsub.s32 0, %v230
        %v232 = vrot.slane %v226, %v231
        %v233 = vlaneseq
        %v234 = vshrl.u32 %v233, 7
        %v235 = vsub.s32 1, %v234
        %v236 = vrot.slane %v226, %v235
        %vm237 = vcmp.eq.s32.totalorder %v228, %v232
        %vm238 = vcmp.eq.s32.totalorder %v228, %v236
        %vm239 = vcmp.ne.s32.totalorder %v226, 255
        %v240 = vsel %vm239, 1, 0
        %v241 = vlaneseq
        %v242 = vshrl.u32 %v241, 7
        %v243 = vsub.s32 0, %v242
        %v244 = vrot.slane %v240, %v243
        %v245 = vlaneseq
        %v246 = vshrl.u32 %v245, 7
        %v247 = vsub.s32 1, %v246
        %v248 = vrot.slane %v240, %v247
        %vm249 = vcmp.eq.s32.totalorder %v244, 1
        %vm250 = vcmp.eq.s32.totalorder %v248, 1
        %vm251 = vmand %vm237, %vm249
        %vm252 = vmand %vm238, %vm250
        %vm253 = vcmp.ne.s32.totalorder %v228, 0
        %vm254 = vmand %vm251, %vm253
        %vm255 = vmand %vm252, %vm253
        %v256 = vsel %vm254, 1, 0
        %v257 = vsel %vm255, 1, 0
        %v258 = vcvt.s32.f32 %v256
        %v259 = vcvt.s32.f32 %v257
        %v260 = vmax.f32 %v225, 0.0
        %v263 = vcombine.low %v258, %v259
        %v265 = vmul.f32 %v225, %v263
        %v266 = vsub.f32 %v260, %v265
        %v267 = vand.u32 2147483647, %v225
        %v268 = vsub.f32 0.0, %v267
        %v269 = vmul.f32 %v268, 1.442695
        %v270 = vpow.pop %v269
        %v271 = vadd.f32 %v270, 1.0
        %v272 = vlog2.pop %v271
        %v273 = vmul.f32 %v272, 0.6931472
        %v274 = vmul.f32 -0.5, %v270
        %v275 = vadd.f32 %v274, 1.0
        %v276 = vmul.f32 %v275, %v270
        %v277 = vand.u32 2147483647, %v270
        %vm278 = vcmp.lt.f32.partialorder %v277, 0.0004427343
        %v279 = vsel %vm278, %v276, %v273
        %v280 = vadd.f32 %v266, %v279
        %v281 = vld [vmem:[#allocation2] sm:$0xff]
        %v282 = vadd.f32 %v281, %v280
        %283 = vst [vmem:[#allocation2] sm:$0xff] %v282
        // Predicated region
        $region41: #{tpu_custom_call.1} parent=27 // pred_check
          %p284 = pneg %p220
        $region42: #{tpu_custom_call.1} parent=27 // pred_check_branch
          %286 = sbr.rel (%p284) target = $region44
        $region43: #{tpu_custom_call.1} parent=27 // pred_region
          %v287 = vld [vmem:[#allocation2] sm:$0xff]
          %v289 = vcombine.high %v287, %v287
          %vm291 = vcmask 1043456
          %v292 = vsel %vm291, %v287, 0.0
          %v293 = vsel %vm291, %v289, 0.0
          %v294 = vadd.f32 %v292, %v293
          %295 = vadd.xlane.f32.xlu0 %v294
          %v296 = vpop.xlane.xlu0 %295
          %v297 = vrot.slane %v296, 4
          %v298 = vadd.f32 %v296, %v297
          %v299 = vrot.slane %v298, 2
          %v300 = vadd.f32 %v298, %v299
          %v301 = vrot.slane %v300, 1
          %v302 = vadd.f32 %v300, %v301
          %s303 = vtos %v302
          %v304 = vlaneseq
          %v305 = vand.u32 %v304, 127
          %vm306 = vcmp.eq.s32.totalorder %v228, 0
          %vm307 = vcmp.eq.s32.totalorder %v305, 0
          %vm308 = vmand %vm306, %vm307
          %v309 = vstv %s303
          %v310 = vsel %vm308, %v309, 0.0
          %311 = vst [vmem:[%s217] sm:$0xff] %v310
        $region44: #{tpu_custom_call.1} parent=27 // pred_fallthru
          _
        %s312 = sand.u32 %s98, 1
        %s313 = scalar_lea.sflag [#allocation5], %s312
        %s314 = sand.u32 %s98, 1
        %s315 = smul.addr %s314, 8
        %s316 = scalar_lea.vmem [#allocation8], %s315
        // Predicated region
        $region45: #{tpu_custom_call.1} parent=27 // pred_check
          %p317 = pneg %p108
        $region46: #{tpu_custom_call.1} parent=27 // pred_check_branch
          %319 = sbr.rel (%p317) target = $region48
        $region47: #{tpu_custom_call.1} parent=27 // pred_region
          %s321 = ssub.s32 128, 128
          %322 = vsyncadd %s313, %s321
          %s323 = smul.addr %s26, 128
          %s324 = scalar_lea.hbm %s2, %s323
          %s326 = sshll.u32 %s316, 4
          %s327 = int_to_ptr.vmem [resolvable:$true] %s326
          %329 = dma.vmem_to_hbm [thread:$0]  %s327, 128, %s324, %s313
        $region48: #{tpu_custom_call.1} parent=27 // pred_fallthru
          _
      $region28: #{tpu_custom_call.1} parent=5 // pred_fallthru
        _
      %p330 = scmp.le.s32.totalorder 2, %s17
      // Predicated region
      $region49: #{tpu_custom_call.1} parent=5 // pred_check
        %p331 = pneg %p330
      $region50: #{tpu_custom_call.1} parent=5 // pred_check_branch
        %333 = sbr.rel (%p331) target = $region52
      $region51: #{tpu_custom_call.1} parent=5 // pred_region
        %s334 = ssub.s32 %s17, 2
        // Predicated region
        $region53: #{tpu_custom_call.1} parent=51 // pred_check
          %p335 = pneg %p114
        $region54: #{tpu_custom_call.1} parent=51 // pred_check_branch
          %337 = sbr.rel (%p335) target = $region56
        $region55: #{tpu_custom_call.1} parent=51 // pred_region
          %s338 = sand.u32 %s99, 1
          %s339 = scalar_lea.sflag [#allocation5], %s338
          %s340 = sand.u32 %s99, 1
          %s341 = smul.addr %s340, 8
          %s342 = scalar_lea.vmem [#allocation8], %s341
          %343 = dma.done %s339, 128
        $region56: #{tpu_custom_call.1} parent=51 // pred_fallthru
          _
      $region52: #{tpu_custom_call.1} parent=5 // pred_fallthru
        _
    $region6: #{tpu_custom_call.1} parent=1 // loop_footer
      %s21 = sadd.s32 1, %s17
    $region7: #{tpu_custom_call.1} parent=1 // loop_footer_branch
      %16 = sbr.rel target = $region3
    $region8: #{tpu_custom_call.1} parent=1 // loop_exit
      _
    %344 = vsyncpa [#allocation4], 1
    %s345 = scalar_lea.sflag [#allocation4], 1
    %346 = vsyncpa %s345, 1
    %347 = vsyncpa [#allocation7], 1
    %s348 = scalar_lea.sflag [#allocation7], 1
    %349 = vsyncpa %s348, 1
    %350 = vsyncpa [#allocation5], 1
    %s351 = scalar_lea.sflag [#allocation5], 1
    %352 = vsyncpa %s351, 1

</llo_original>
